<compile_context>
chip_gen: v5e
topology: v5e:2x2
jax: 0.10.0
libtpu: 0.0.40
codegen_flags: <defaults>
</compile_context>

<pallas_src>
import functools

import jax
import jax.numpy as jnp
import numpy as np
from jax.experimental import pallas as pl
from jax.experimental.pallas import tpu as pltpu


_LANE = 128
_LANE_CANDIDATES = (2048, 1024, 512, 256, 128)
# Below this size a standalone Pallas call is pure launch + HBM round-trip
# overhead; let XLA fuse the elementwise fake-quant with its neighbours.
_MIN_PALLAS_BYTES = 256 * 1024
# TODO(synk): the biggest real-world win is fusing this fake-quant as an
# epilogue of the producing/consuming matmul kernel; out of scope here.


# ----------------------------------------------------------------------------
# Quantizer arithmetic (shared by kernel, jnp fallback and reference)
# ----------------------------------------------------------------------------
def _quant_constants(bits, minv, maxv, signed):
    maxv_abs = max(abs(float(minv)), abs(float(maxv)))
    clip_min = -maxv_abs if signed else 0.0
    clip_max = float(maxv_abs)
    num_levels = 2 ** bits
    scale = (clip_max - clip_min) / (num_levels - 2)
    inv_scale = 1.0 / scale
    q_min = float(-(num_levels // 2)) if signed else 0.0
    q_max = float(num_levels // 2 - 1) if signed else float(num_levels - 1)
    return clip_min, clip_max, scale, inv_scale, q_min, q_max


def _quant_math(x, clip_min, clip_max, scale, inv_scale, q_min, q_max, out_dtype):
    # Multiply-by-reciprocal instead of division (<= 1 ulp from the PyTorch
    # reference's x / scale; harmless for fake quantization).  Compute in f32
    # (HBM-bound kernel, so the upcast costs nothing and keeps v5e happy).
    xf = x.astype(jnp.float32)
    xf = jnp.clip(xf, clip_min, clip_max)
    xq = jnp.round(xf * inv_scale)
    xq = jnp.clip(xq, q_min, q_max)   # kept: robust if the range becomes asymmetric
    return (xq * scale).astype(out_dtype)


def _quant_kernel(x_ref, o_ref, *, clip_min, clip_max, scale, inv_scale,
                  q_min, q_max):
    o_ref[...] = _quant_math(x_ref[...], clip_min, clip_max, scale, inv_scale,
                             q_min, q_max, o_ref.dtype)


# ----------------------------------------------------------------------------
# Tiling helpers
# ----------------------------------------------------------------------------
@functools.lru_cache(maxsize=1)
def _block_budget():
    """(block_target_bytes, vmem_limit_bytes) keyed off physical VMEM size."""
    vmem = 0
    try:
        info = pltpu.get_tpu_info()
        vmem = int(getattr(info, "vmem_capacity_bytes", 0) or 0)
    except Exception:
        vmem = 0
    if vmem >= 100 * 1024 * 1024:
        # v5e / v6e (128 MiB VMEM): 4 MiB blocks are a small free win.
        return 4 * 1024 * 1024, 64 * 1024 * 1024
    # v7x (64 MiB VMEM) or unknown: ~2 MiB blocks -> <=~8 MiB pipelined set.
    return 2 * 1024 * 1024, 32 * 1024 * 1024


def _sublane_multiple(dtype):
    """Packed-tile sublane multiple: 8 (f32), 16 (bf16/f16), 32 (int8/fp8)."""
    itemsize = np.dtype(dtype).itemsize
    if itemsize >= 4:
        return 8
    if itemsize == 2:
        return 16
    return 32


def _pick_lanes(total, sub):
    """Largest lane width (multiple of 128) dividing `total`, preferring one
    that leaves at least `sub` rows.  None if even 128 does not divide."""
    fallback = None
    for lanes in _LANE_CANDIDATES:
        if total % lanes == 0:
            if total // lanes >= sub:
                return lanes
            if fallback is None:
                fallback = lanes
    return fallback


def _pick_block_rows(rows, lanes, itemsize, sub, target_bytes):
    """Rows per block: a multiple of `sub`, roughly `target_bytes` per block,
    and at least two grid steps whenever `rows` allows it (v7x megacore)."""
    if rows <= sub:
        return rows                                  # single full-extent block
    target = max(sub, (target_bytes // (lanes * itemsize)) // sub * sub)
    if target >= rows and rows >= 2 * sub:
        target = max(sub, (rows // 2) // sub * sub)  # force grid >= 2
    return min(target, pl.cdiv(rows, sub) * sub)


# ----------------------------------------------------------------------------
# Pallas runner on a flat, 128-aligned buffer
# ----------------------------------------------------------------------------
def _quant_flat_pallas(flat, lanes, consts):
    clip_min, clip_max, scale, inv_scale, q_min, q_max = consts
    dtype = flat.dtype
    total = flat.shape[0]
    rows = total // lanes
    sub = _sublane_multiple(dtype)
    target_bytes, vmem_limit = _block_budget()
    block_rows = _pick_block_rows(rows, lanes, np.dtype(dtype).itemsize, sub,
                                  target_bytes)
    grid = pl.cdiv(rows, block_rows)        # last block may be partial (masked)
    slab = jnp.reshape(flat, (rows, lanes))

    kernel = functools.partial(
        _quant_kernel, clip_min=clip_min, clip_max=clip_max, scale=scale,
        inv_scale=inv_scale, q_min=q_min, q_max=q_max)

    out = pl.pallas_call(
        kernel,
        out_shape=jax.ShapeDtypeStruct((rows, lanes), dtype),
        grid_spec=pltpu.PrefetchScalarGridSpec(
            num_scalar_prefetch=0,
            grid=(grid,),
            in_specs=[pl.BlockSpec((block_rows, lanes), lambda i: (i, 0))],
            out_specs=pl.BlockSpec((block_rows, lanes), lambda i: (i, 0)),
        ),
        compiler_params=pltpu.CompilerParams(
            dimension_semantics=("parallel",),
            vmem_limit_bytes=vmem_limit,
        ),
    )(slab)
    return jnp.reshape(out, (-1,))


# ----------------------------------------------------------------------------
# Public quantizer wrapper
# ----------------------------------------------------------------------------
def uniform_symmetric_quantizer_pallas(x, *, bits, minv=-2.0, maxv=2.0,
                                       signed=True, force_pallas=False):
    """Matches uniform_symmetric_quantizer(x, bits, minv=-2, maxv=2, signed=True)."""
    consts = _quant_constants(bits, minv, maxv, signed)
    orig_shape = x.shape
    total = int(np.prod(orig_shape)) if orig_shape else 1
    nbytes = total * np.dtype(x.dtype).itemsize

    if total == 0 or (not force_pallas and nbytes < _MIN_PALLAS_BYTES):
        # Small activations: plain jnp so XLA can fuse with neighbours.
        return _quant_math(x, *consts, out_dtype=x.dtype)

    sub = _sublane_multiple(x.dtype)
    flat = jnp.reshape(x, (-1,))
    lanes = _pick_lanes(total, sub)
    if lanes is not None:
        out_flat = _quant_flat_pallas(flat, lanes, consts)
    else:
        # Ragged element count: Pallas on the 128-aligned prefix, plain jnp on
        # the (<128-element) tail.  Avoids whole-array pad + slice copies.
        main = (total // _LANE) * _LANE
        if main == 0:
            return _quant_math(x, *consts, out_dtype=x.dtype)
        head = _quant_flat_pallas(flat[:main], _pick_lanes(main, sub), consts)
        tail = _quant_math(flat[main:], *consts, out_dtype=x.dtype)
        out_flat = jnp.concatenate([head, tail])
    return jnp.reshape(out_flat, orig_shape)


# ----------------------------------------------------------------------------
# QuantAct module (JAX port).  Buffers held as plain python/JAX state.
# ----------------------------------------------------------------------------
class QuantAct:
    def __init__(self, act_bits, get_stats, minv=None, maxv=None,
                 cali_sample_size=512, cali_batch_size=4, topk=10):
        self.act_bits = act_bits
        self.get_stats = get_stats
        self.index = 0
        self.topk = topk
        self.sample_batches = cali_sample_size // cali_batch_size
        stats_size = (self.sample_batches, self.topk) if self.get_stats else (1,)
        self.minv = jnp.zeros(stats_size, dtype=jnp.float32)
        self.maxv = jnp.zeros(stats_size, dtype=jnp.float32)
        self.quant_minv = jnp.zeros((1,), dtype=jnp.float32)
        self.quant_maxv = jnp.zeros((1,), dtype=jnp.float32)

    def __call__(self, x):
        if self.get_stats:
            # TODO(synk): calibration sort/top-k bookkeeping stays in plain JAX
            # (no in-kernel sort on TPU Pallas); calibration-only, not jit-safe.
            if self.index < min(128, self.sample_batches):
                y = jnp.sort(jnp.reshape(x, (-1,)))
                self.minv = self.minv.at[self.index, :].set(y[: self.topk])
                self.maxv = self.maxv.at[self.index, :].set(y[-self.topk:])
                pick = min(4, self.topk - 1)
                self.quant_minv = self.minv[self.index, pick]
                self.quant_maxv = self.maxv[self.index, pick]
            else:
                self.quant_minv = jnp.min(self.minv)
                self.quant_maxv = jnp.max(self.maxv)
            self.index += 1
        if self.act_bits > 0:
            x = uniform_symmetric_quantizer_pallas(
                x, bits=self.act_bits, minv=-2.0, maxv=2.0, signed=True)
        return x


# ----------------------------------------------------------------------------
# Pure-JAX reference (same reciprocal-multiply arithmetic as the kernel)
# ----------------------------------------------------------------------------
def _quant_ref(x, bits, minv=-2.0, maxv=2.0, signed=True):
    consts = _quant_constants(bits, minv, maxv, signed)
    return _quant_math(x, *consts, out_dtype=x.dtype)


if __name__ == "__main__":
    key = jax.random.PRNGKey(0)
    k1, k2, k3, k4 = jax.random.split(key, 4)

    # 1) Small conv-style activation (NCHW 2x4x16x16): below the dispatch
    #    threshold -> fused plain-jnp path inside QuantAct (by design).
    x_small = jax.random.normal(k1, (2, 4, 16, 16), dtype=jnp.float32) * 1.5
    qact = QuantAct(act_bits=8, get_stats=False)
    y_small = jax.block_until_ready(qact(x_small))
    assert y_small.shape == x_small.shape and y_small.dtype == x_small.dtype
    np.testing.assert_allclose(np.asarray(y_small),
                               np.asarray(_quant_ref(x_small, bits=8)),
                               rtol=0.0, atol=1e-6)

    # 2) Larger f32 activation: exercises the Pallas slab kernel (aligned path).
    x_f32 = jax.random.normal(k2, (8, 16, 32, 32), dtype=jnp.float32) * 1.5
    y_f32 = jax.block_until_ready(
        uniform_symmetric_quantizer_pallas(x_f32, bits=8))
    np.testing.assert_allclose(np.asarray(y_f32),
                               np.asarray(_quant_ref(x_f32, bits=8)),
                               rtol=0.0, atol=1e-6)

    # 3) Ragged element count: Pallas prefix + jnp tail, partial last block.
    x_rag = jax.random.normal(k3, (257, 515), dtype=jnp.float32) * 1.5
    y_rag = jax.block_until_ready(
        uniform_symmetric_quantizer_pallas(x_rag, bits=8))
    np.testing.assert_allclose(np.asarray(y_rag),
                               np.asarray(_quant_ref(x_rag, bits=8)),
                               rtol=0.0, atol=1e-6)

    # 4) bf16 activation: dtype-aware (16-row) sublane blocking.
    x_bf16 = (jax.random.normal(k4, (8, 16, 32, 32), dtype=jnp.float32) * 1.5
              ).astype(jnp.bfloat16)
    y_bf16 = jax.block_until_ready(
        uniform_symmetric_quantizer_pallas(x_bf16, bits=8))
    np.testing.assert_allclose(
        np.asarray(y_bf16.astype(jnp.float32)),
        np.asarray(_quant_ref(x_bf16, bits=8).astype(jnp.float32)),
        rtol=0.0, atol=1e-6)

    # 5) Calibration-style module: stats bookkeeping (plain JAX) + quantize.
    qact_stats = QuantAct(act_bits=8, get_stats=True,
                          cali_sample_size=512, cali_batch_size=4, topk=10)
    y_stats = jax.block_until_ready(qact_stats(x_small))
    np.testing.assert_allclose(np.asarray(y_stats), np.asarray(y_small),
                               rtol=0.0, atol=1e-6)
    assert qact_stats.index == 1 and qact_stats.minv.shape == (128, 10)

    print("KERNEL_OK")
</pallas_src>

<mosaic_0001>
module attributes {stable_mosaic.version = 11 : i64} {
  func.func @_quant_kernel(%arg0: i32, %arg1: memref<32x2048xf32, #tpu.memory_space<vmem>>, %arg2: memref<32x2048xf32, #tpu.memory_space<vmem>>) attributes {dimension_semantics = [#tpu.dimension_semantics<parallel>], iteration_bounds = array<i64: 2>, scalar_prefetch = 0 : i64, scratch_operands = 0 : i64, tpu.core_type = #tpu.core_type<tc>, window_params = [{transform_indices = @transform_0, window_bounds = array<i64: 32, 2048>}, {transform_indices = @transform_1, window_bounds = array<i64: 32, 2048>}]} {
    %c0 = arith.constant 0 : index
    %c0_0 = arith.constant 0 : index
    %0 = vector.load %arg1[%c0, %c0_0] : memref<32x2048xf32, #tpu.memory_space<vmem>>, vector<32x2048xf32>
    %cst = arith.constant -2.000000e+00 : f32
    %cst_1 = arith.constant 2.000000e+00 : f32
    %1 = vector.broadcast %cst : f32 to vector<32x2048xf32>
    %2 = arith.maximumf %1, %0 : vector<32x2048xf32>
    %3 = vector.broadcast %cst_1 : f32 to vector<32x2048xf32>
    %4 = arith.minimumf %3, %2 : vector<32x2048xf32>
    %cst_2 = arith.constant 6.350000e+01 : f32
    %5 = vector.broadcast %cst_2 : f32 to vector<32x2048xf32>
    %6 = arith.mulf %4, %5 : vector<32x2048xf32>
    %7 = math.roundeven %6 : vector<32x2048xf32>
    %cst_3 = arith.constant -1.280000e+02 : f32
    %cst_4 = arith.constant 1.270000e+02 : f32
    %8 = vector.broadcast %cst_3 : f32 to vector<32x2048xf32>
    %9 = arith.maximumf %8, %7 : vector<32x2048xf32>
    %10 = vector.broadcast %cst_4 : f32 to vector<32x2048xf32>
    %11 = arith.minimumf %10, %9 : vector<32x2048xf32>
    %cst_5 = arith.constant 0.0157480314 : f32
    %12 = vector.broadcast %cst_5 : f32 to vector<32x2048xf32>
    %13 = arith.mulf %11, %12 : vector<32x2048xf32>
    %c0_6 = arith.constant 0 : index
    %c0_7 = arith.constant 0 : index
    %14 = vector.load %arg2[%c0_6, %c0_7] : memref<32x2048xf32, #tpu.memory_space<vmem>>, vector<32x2048xf32>
    tpu.vector_store %arg2[%c0_6, %c0_7], %13 {strides = array<i32>} : memref<32x2048xf32, #tpu.memory_space<vmem>>, vector<32x2048xf32>,
    return
  }
  func.func @transform_0(%arg0: i32) -> (i32, i32) {
    %c0_i32 = arith.constant 0 : i32
    %c0_i32_0 = arith.constant 0 : i32
    return %arg0, %c0_i32 : i32, i32
  }
  func.func @transform_1(%arg0: i32) -> (i32, i32) {
    %c0_i32 = arith.constant 0 : i32
    %c0_i32_0 = arith.constant 0 : i32
    return %arg0, %c0_i32 : i32, i32
  }
}

</mosaic_0001>

<llo_original>
// kernel: tpu_custom_call.1
$region0: #{tpu_custom_call.1}
  #allocation0 [shape = 'u32[]', space=smem, size = 0x4, offset = 0x4, fixed_abs, tag = 'smem constant byte address 0x4 - core index']
  #allocation1 [shape = 'u32[72,128]{1,0:T(1,128)}', space=vmem, size = 0x9000, scoped, tag = 'internal scratch']
  %s0 = inlined_call_operand.hbm [shape: f32[64,2048], index: 0, kind: input, shape index: {}]
  %s1 = inlined_call_operand.hbm [shape: f32[64,2048], index: 1, kind: output, shape index: {}]
  %s2 = sld [smem:[#allocation0]]
  $region41: #{tpu_custom_call.1} parent=0
    _
  %s4 = ssub.s32 1, %s2
  %s5 = scalar_select 0, %s4, %s2
  $region1: #{tpu_custom_call.1} parent=0
    #allocation2 [shape = 'u8[524288]{0}', space=vmem, size = 0x80000, scoped, tag = 'input window, operand 0']
    #allocation3 [shape = 's32[2]{0}', space=sflag, size = 0x8, scoped, tag = 'scoped memory for tpu_custom_call.1']
    #allocation4 [shape = 's32[2]{0}', space=sflag, size = 0x8, scoped, tag = 'scoped memory for tpu_custom_call.1']
    #allocation5 [shape = 'u8[524288]{0}', space=vmem, size = 0x80000, scoped, tag = 'output window, operand 0']
    %6 = vsyncpa [#allocation3], 0
    %s7 = scalar_lea.sflag [#allocation3], 1
    %8 = vsyncpa %s7, 0
    %9 = vsyncpa [#allocation4], 0
    %s10 = scalar_lea.sflag [#allocation4], 1
    %11 = vsyncpa %s10, 0
    loop: start=0, step=1, limit=4
    $region2: #{tpu_custom_call.1} parent=1 // loop_pre_header
      _
    $region3: #{tpu_custom_call.1} parent=1 // loop_header
      %s13 = sphi 0, %s17
      %p14 = scmp.ge.s32.totalorder %s13, 4
      %s23 = sphi 0, %s25
      %s26 = sphi 0, %s23
      %s27 = sphi 0, %s26
      %s43 = sphi 0, %s27
      %s49 = sphi 0, %s51
      %s52 = sphi 0, %s49
      %s53 = sphi 0, %s52
      %s69 = sphi 0, %s53
    $region4: #{tpu_custom_call.1} parent=1 // loop_header_branch
      %16 = sbr.rel (%p14) target = $region8
    $region5: #{tpu_custom_call.1} parent=1 // loop_body
      %s18 = ssub.s32 %s13, 1
      %s19 = ssub.s32 %s13, 2
      %s20 = sadd.s32 %s13, 1
      %s21 = ssub.s32 %s13, %s20
      %p22 = scmp.eq.s32.totalorder %s21, 0
      %s24 = sadd.s32 %s23, 1
      %s25 = scalar_select %p22, %s23, %s24
      %p28 = pneg %p22
      %p29 = scmp.eq.s32.totalorder %s13, 1
      %p30 = por %p28, %p29
      %p31 = scmp.ne.s32.totalorder %s23, %s26
      %p32 = scmp.eq.s32.totalorder %s13, 0
      %p33 = por %p31, %p32
      %p34 = scmp.ne.s32.totalorder %s23, %s26
      %p35 = scmp.eq.s32.totalorder %s18, 1
      %p36 = por %p34, %p35
      %p37 = scmp.ne.s32.totalorder %s26, %s27
      %p38 = scmp.eq.s32.totalorder %s18, 0
      %p39 = por %p37, %p38
      %p40 = scmp.ne.s32.totalorder %s26, %s27
      %p41 = scmp.eq.s32.totalorder %s19, 1
      %p42 = por %p40, %p41
      %p44 = scmp.ne.s32.totalorder %s27, %s43
      %p45 = scmp.eq.s32.totalorder %s19, 0
      %p46 = por %p44, %p45
      %s47 = ssub.s32 %s13, %s20
      %p48 = scmp.eq.s32.totalorder %s47, 0
      %s50 = sadd.s32 %s49, 1
      %s51 = scalar_select %p48, %s49, %s50
      %p54 = pneg %p48
      %p55 = scmp.eq.s32.totalorder %s13, 1
      %p56 = por %p54, %p55
      %p57 = scmp.ne.s32.totalorder %s49, %s52
      %p58 = scmp.eq.s32.totalorder %s13, 0
      %p59 = por %p57, %p58
      %p60 = scmp.ne.s32.totalorder %s49, %s52
      %p61 = scmp.eq.s32.totalorder %s18, 1
      %p62 = por %p60, %p61
      %p63 = scmp.ne.s32.totalorder %s52, %s53
      %p64 = scmp.eq.s32.totalorder %s18, 0
      %p65 = por %p63, %p64
      %p66 = scmp.ne.s32.totalorder %s52, %s53
      %p67 = scmp.eq.s32.totalorder %s19, 1
      %p68 = por %p66, %p67
      %p70 = scmp.ne.s32.totalorder %s53, %s69
      %p71 = scmp.eq.s32.totalorder %s19, 0
      %p72 = por %p70, %p71
      %p73 = scmp.le.s32.totalorder 1, %s13
      %p74 = scmp.lt.s32.totalorder %s13, 3
      %p75 = pnand %p73, %p74
      %p76 = pneg %p75
      // Predicated region
      $region9: #{tpu_custom_call.1} parent=5 // pred_check
        _
      $region10: #{tpu_custom_call.1} parent=5 // pred_check_branch
        %78 = sbr.rel (%p75) target = $region12
      $region11: #{tpu_custom_call.1} parent=5 // pred_region
        %s79 = ssub.s32 %s13, 1
      $region12: #{tpu_custom_call.1} parent=5 // pred_fallthru
        _
      %p80 = scmp.lt.s32.totalorder %s13, 2
      // Predicated region
      $region13: #{tpu_custom_call.1} parent=5 // pred_check
        %p81 = pneg %p80
      $region14: #{tpu_custom_call.1} parent=5 // pred_check_branch
        %83 = sbr.rel (%p81) target = $region16
      $region15: #{tpu_custom_call.1} parent=5 // pred_region
        // Predicated region
        $region17: #{tpu_custom_call.1} parent=15 // pred_check
          %p84 = pneg %p33
        $region18: #{tpu_custom_call.1} parent=15 // pred_check_branch
          %86 = sbr.rel (%p84) target = $region20
        $region19: #{tpu_custom_call.1} parent=15 // pred_region
          %s87 = sand.u32 %s23, 1
          %s88 = scalar_lea.sflag [#allocation3], %s87
          %s89 = sand.u32 %s23, 1
          %s90 = smul.addr %s89, 512
          %s91 = scalar_lea.vmem [#allocation2], %s90
          %s92 = smul.u32 4, %s13
          %94 = vsyncadd %s88, 0
          %s95 = smul.addr %s92, 16
          %s96 = smul.addr %s95, 8
          %s97 = scalar_lea.hbm %s0, %s96
          %s98 = sshll.u32 %s97, 4
          %s99 = int_to_ptr.hbm [resolvable:$true] %s98
          %s100 = sshll.u32 %s91, 4
          %s101 = int_to_ptr.vmem [resolvable:$true] %s100
          %106 = dma.hbm_to_vmem [thread:$0]  %s99, 8192, %s101, %s88, 2048, 2048, 128
        $region20: #{tpu_custom_call.1} parent=15 // pred_fallthru
          _
      $region16: #{tpu_custom_call.1} parent=5 // pred_fallthru
        _
      %p107 = scmp.le.s32.totalorder 1, %s13
      %p108 = scmp.lt.s32.totalorder %s13, 3
      %p109 = pnand %p107, %p108
      %p110 = pneg %p109
      // Predicated region
      $region21: #{tpu_custom_call.1} parent=5 // pred_check
        _
      $region22: #{tpu_custom_call.1} parent=5 // pred_check_branch
        %112 = sbr.rel (%p109) target = $region24
      $region23: #{tpu_custom_call.1} parent=5 // pred_region
        %s113 = ssub.s32 %s13, 1
        %s114 = sand.u32 %s26, 1
        %s115 = scalar_lea.sflag [#allocation3], %s114
        %s116 = sand.u32 %s26, 1
        %s117 = smul.addr %s116, 512
        %s118 = scalar_lea.vmem [#allocation2], %s117
        // Predicated region
        $region25: #{tpu_custom_call.1} parent=23 // pred_check
          %p119 = pneg %p39
        $region26: #{tpu_custom_call.1} parent=23 // pred_check_branch
          %121 = sbr.rel (%p119) target = $region28
        $region27: #{tpu_custom_call.1} parent=23 // pred_region
          %123 = dma.done %s115, 8192
        $region28: #{tpu_custom_call.1} parent=23 // pred_fallthru
          _
        %s124 = sand.u32 %s26, 1
        %s125 = scalar_lea.sflag [#allocation3], %s124
        %s126 = sand.u32 %s26, 1
        %s127 = smul.addr %s126, 512
        %s128 = scalar_lea.vmem [#allocation2], %s127
        %p129 = pneg %p39
        %p130 = pneg %p36
        %p131 = pneg %p65
        %p132 = pneg %p62
        %s133 = sand.u32 %s52, 1
        %s134 = scalar_lea.sflag [#allocation4], %s133
        %s135 = sand.u32 %s52, 1
        %s136 = smul.addr %s135, 512
        %s137 = scalar_lea.vmem [#allocation5], %s136
        %s138 = smul.u32 4, %s18
        %s139 = smul.u32 4, %s18
        %v140 = vld [vmem:[%s118] sm:$0xff]
        %v141 = vld [vmem:[%s118 + $0x8] sm:$0xff]
        %v142 = vld [vmem:[%s118 + $0x10] sm:$0xff]
        %v143 = vld [vmem:[%s118 + $0x18] sm:$0xff]
        %v144 = vld [vmem:[%s118 + $0x20] sm:$0xff]
        %v145 = vld [vmem:[%s118 + $0x28] sm:$0xff]
        %v146 = vld [vmem:[%s118 + $0x30] sm:$0xff]
        %v147 = vld [vmem:[%s118 + $0x38] sm:$0xff]
        %v148 = vld [vmem:[%s118 + $0x40] sm:$0xff]
        %v149 = vld [vmem:[%s118 + $0x48] sm:$0xff]
        %v150 = vld [vmem:[%s118 + $0x50] sm:$0xff]
        %v151 = vld [vmem:[%s118 + $0x58] sm:$0xff]
        %v152 = vld [vmem:[%s118 + $0x60] sm:$0xff]
        %v153 = vld [vmem:[%s118 + $0x68] sm:$0xff]
        %v154 = vld [vmem:[%s118 + $0x70] sm:$0xff]
        %v155 = vld [vmem:[%s118 + $0x78] sm:$0xff]
        %v156 = vld [vmem:[%s118 + $0x80] sm:$0xff]
        %v157 = vld [vmem:[%s118 + $0x88] sm:$0xff]
        %v158 = vld [vmem:[%s118 + $0x90] sm:$0xff]
        %v159 = vld [vmem:[%s118 + $0x98] sm:$0xff]
        %v160 = vld [vmem:[%s118 + $0xa0] sm:$0xff]
        %v161 = vld [vmem:[%s118 + $0xa8] sm:$0xff]
        %v162 = vld [vmem:[%s118 + $0xb0] sm:$0xff]
        %v163 = vld [vmem:[%s118 + $0xb8] sm:$0xff]
        %v164 = vld [vmem:[%s118 + $0xc0] sm:$0xff]
        %v165 = vld [vmem:[%s118 + $0xc8] sm:$0xff]
        %v166 = vld [vmem:[%s118 + $0xd0] sm:$0xff]
        %v167 = vld [vmem:[%s118 + $0xd8] sm:$0xff]
        %v168 = vld [vmem:[%s118 + $0xe0] sm:$0xff]
        %v169 = vld [vmem:[%s118 + $0xe8] sm:$0xff]
        %v170 = vld [vmem:[%s118 + $0xf0] sm:$0xff]
        %v171 = vld [vmem:[%s118 + $0xf8] sm:$0xff]
        %v172 = vld [vmem:[%s118 + $0x100] sm:$0xff]
        %v173 = vld [vmem:[%s118 + $0x108] sm:$0xff]
        %v174 = vld [vmem:[%s118 + $0x110] sm:$0xff]
        %v175 = vld [vmem:[%s118 + $0x118] sm:$0xff]
        %v176 = vld [vmem:[%s118 + $0x120] sm:$0xff]
        %v177 = vld [vmem:[%s118 + $0x128] sm:$0xff]
        %v178 = vld [vmem:[%s118 + $0x130] sm:$0xff]
        %v179 = vld [vmem:[%s118 + $0x138] sm:$0xff]
        %v180 = vld [vmem:[%s118 + $0x140] sm:$0xff]
        %v181 = vld [vmem:[%s118 + $0x148] sm:$0xff]
        %v182 = vld [vmem:[%s118 + $0x150] sm:$0xff]
        %v183 = vld [vmem:[%s118 + $0x158] sm:$0xff]
        %v184 = vld [vmem:[%s118 + $0x160] sm:$0xff]
        %v185 = vld [vmem:[%s118 + $0x168] sm:$0xff]
        %v186 = vld [vmem:[%s118 + $0x170] sm:$0xff]
        %v187 = vld [vmem:[%s118 + $0x178] sm:$0xff]
        %v188 = vld [vmem:[%s118 + $0x180] sm:$0xff]
        %v189 = vld [vmem:[%s118 + $0x188] sm:$0xff]
        %v190 = vld [vmem:[%s118 + $0x190] sm:$0xff]
        %v191 = vld [vmem:[%s118 + $0x198] sm:$0xff]
        %v192 = vld [vmem:[%s118 + $0x1a0] sm:$0xff]
        %v193 = vld [vmem:[%s118 + $0x1a8] sm:$0xff]
        %v194 = vld [vmem:[%s118 + $0x1b0] sm:$0xff]
        %v195 = vld [vmem:[%s118 + $0x1b8] sm:$0xff]
        %v196 = vld [vmem:[%s118 + $0x1c0] sm:$0xff]
        %v197 = vld [vmem:[%s118 + $0x1c8] sm:$0xff]
        %v198 = vld [vmem:[%s118 + $0x1d0] sm:$0xff]
        %v199 = vld [vmem:[%s118 + $0x1d8] sm:$0xff]
        %v200 = vld [vmem:[%s118 + $0x1e0] sm:$0xff]
        %v201 = vld [vmem:[%s118 + $0x1e8] sm:$0xff]
        %v202 = vld [vmem:[%s118 + $0x1f0] sm:$0xff]
        %v203 = vld [vmem:[%s118 + $0x1f8] sm:$0xff]
        %v204 = vmax.f32 %v140, -2.0
        %v205 = vmax.f32 %v141, -2.0
        %v206 = vmax.f32 %v142, -2.0
        %v207 = vmax.f32 %v143, -2.0
        %v208 = vmax.f32 %v144, -2.0
        %v209 = vmax.f32 %v145, -2.0
        %v210 = vmax.f32 %v146, -2.0
        %v211 = vmax.f32 %v147, -2.0
        %v212 = vmax.f32 %v148, -2.0
        %v213 = vmax.f32 %v149, -2.0
        %v214 = vmax.f32 %v150, -2.0
        %v215 = vmax.f32 %v151, -2.0
        %v216 = vmax.f32 %v152, -2.0
        %v217 = vmax.f32 %v153, -2.0
        %v218 = vmax.f32 %v154, -2.0
        %v219 = vmax.f32 %v155, -2.0
        %v220 = vmax.f32 %v156, -2.0
        %v221 = vmax.f32 %v157, -2.0
        %v222 = vmax.f32 %v158, -2.0
        %v223 = vmax.f32 %v159, -2.0
        %v224 = vmax.f32 %v160, -2.0
        %v225 = vmax.f32 %v161, -2.0
        %v226 = vmax.f32 %v162, -2.0
        %v227 = vmax.f32 %v163, -2.0
        %v228 = vmax.f32 %v164, -2.0
        %v229 = vmax.f32 %v165, -2.0
        %v230 = vmax.f32 %v166, -2.0
        %v231 = vmax.f32 %v167, -2.0
        %v232 = vmax.f32 %v168, -2.0
        %v233 = vmax.f32 %v169, -2.0
        %v234 = vmax.f32 %v170, -2.0
        %v235 = vmax.f32 %v171, -2.0
        %v236 = vmax.f32 %v172, -2.0
        %v237 = vmax.f32 %v173, -2.0
        %v238 = vmax.f32 %v174, -2.0
        %v239 = vmax.f32 %v175, -2.0
        %v240 = vmax.f32 %v176, -2.0
        %v241 = vmax.f32 %v177, -2.0
        %v242 = vmax.f32 %v178, -2.0
        %v243 = vmax.f32 %v179, -2.0
        %v244 = vmax.f32 %v180, -2.0
        %v245 = vmax.f32 %v181, -2.0
        %v246 = vmax.f32 %v182, -2.0
        %v247 = vmax.f32 %v183, -2.0
        %v248 = vmax.f32 %v184, -2.0
        %v249 = vmax.f32 %v185, -2.0
        %v250 = vmax.f32 %v186, -2.0
        %v251 = vmax.f32 %v187, -2.0
        %v252 = vmax.f32 %v188, -2.0
        %v253 = vmax.f32 %v189, -2.0
        %v254 = vmax.f32 %v190, -2.0
        %v255 = vmax.f32 %v191, -2.0
        %v256 = vmax.f32 %v192, -2.0
        %v257 = vmax.f32 %v193, -2.0
        %v258 = vmax.f32 %v194, -2.0
        %v259 = vmax.f32 %v195, -2.0
        %v260 = vmax.f32 %v196, -2.0
        %v261 = vmax.f32 %v197, -2.0
        %v262 = vmax.f32 %v198, -2.0
        %v263 = vmax.f32 %v199, -2.0
        %v264 = vmax.f32 %v200, -2.0
        %v265 = vmax.f32 %v201, -2.0
        %v266 = vmax.f32 %v202, -2.0
        %v267 = vmax.f32 %v203, -2.0
        %v268 = vmin.f32 %v204, 2.0
        %v269 = vmin.f32 %v205, 2.0
        %v270 = vmin.f32 %v206, 2.0
        %v271 = vmin.f32 %v207, 2.0
        %v272 = vmin.f32 %v208, 2.0
        %v273 = vmin.f32 %v209, 2.0
        %v274 = vmin.f32 %v210, 2.0
        %v275 = vmin.f32 %v211, 2.0
        %v276 = vmin.f32 %v212, 2.0
        %v277 = vmin.f32 %v213, 2.0
        %v278 = vmin.f32 %v214, 2.0
        %v279 = vmin.f32 %v215, 2.0
        %v280 = vmin.f32 %v216, 2.0
        %v281 = vmin.f32 %v217, 2.0
        %v282 = vmin.f32 %v218, 2.0
        %v283 = vmin.f32 %v219, 2.0
        %v284 = vmin.f32 %v220, 2.0
        %v285 = vmin.f32 %v221, 2.0
        %v286 = vmin.f32 %v222, 2.0
        %v287 = vmin.f32 %v223, 2.0
        %v288 = vmin.f32 %v224, 2.0
        %v289 = vmin.f32 %v225, 2.0
        %v290 = vmin.f32 %v226, 2.0
        %v291 = vmin.f32 %v227, 2.0
        %v292 = vmin.f32 %v228, 2.0
        %v293 = vmin.f32 %v229, 2.0
        %v294 = vmin.f32 %v230, 2.0
        %v295 = vmin.f32 %v231, 2.0
        %v296 = vmin.f32 %v232, 2.0
        %v297 = vmin.f32 %v233, 2.0
        %v298 = vmin.f32 %v234, 2.0
        %v299 = vmin.f32 %v235, 2.0
        %v300 = vmin.f32 %v236, 2.0
        %v301 = vmin.f32 %v237, 2.0
        %v302 = vmin.f32 %v238, 2.0
        %v303 = vmin.f32 %v239, 2.0
        %v304 = vmin.f32 %v240, 2.0
        %v305 = vmin.f32 %v241, 2.0
        %v306 = vmin.f32 %v242, 2.0
        %v307 = vmin.f32 %v243, 2.0
        %v308 = vmin.f32 %v244, 2.0
        %v309 = vmin.f32 %v245, 2.0
        %v310 = vmin.f32 %v246, 2.0
        %v311 = vmin.f32 %v247, 2.0
        %v312 = vmin.f32 %v248, 2.0
        %v313 = vmin.f32 %v249, 2.0
        %v314 = vmin.f32 %v250, 2.0
        %v315 = vmin.f32 %v251, 2.0
        %v316 = vmin.f32 %v252, 2.0
        %v317 = vmin.f32 %v253, 2.0
        %v318 = vmin.f32 %v254, 2.0
        %v319 = vmin.f32 %v255, 2.0
        %v320 = vmin.f32 %v256, 2.0
        %v321 = vmin.f32 %v257, 2.0
        %v322 = vmin.f32 %v258, 2.0
        %v323 = vmin.f32 %v259, 2.0
        %v324 = vmin.f32 %v260, 2.0
        %v325 = vmin.f32 %v261, 2.0
        %v326 = vmin.f32 %v262, 2.0
        %v327 = vmin.f32 %v263, 2.0
        %v328 = vmin.f32 %v264, 2.0
        %v329 = vmin.f32 %v265, 2.0
        %v330 = vmin.f32 %v266, 2.0
        %v331 = vmin.f32 %v267, 2.0
        %v332 = vmul.f32 %v268, 63.5
        %v333 = vmul.f32 %v269, 63.5
        %v334 = vmul.f32 %v270, 63.5
        %v335 = vmul.f32 %v271, 63.5
        %v336 = vmul.f32 %v272, 63.5
        %v337 = vmul.f32 %v273, 63.5
        %v338 = vmul.f32 %v274, 63.5
        %v339 = vmul.f32 %v275, 63.5
        %v340 = vmul.f32 %v276, 63.5
        %v341 = vmul.f32 %v277, 63.5
        %v342 = vmul.f32 %v278, 63.5
        %v343 = vmul.f32 %v279, 63.5
        %v344 = vmul.f32 %v280, 63.5
        %v345 = vmul.f32 %v281, 63.5
        %v346 = vmul.f32 %v282, 63.5
        %v347 = vmul.f32 %v283, 63.5
        %v348 = vmul.f32 %v284, 63.5
        %v349 = vmul.f32 %v285, 63.5
        %v350 = vmul.f32 %v286, 63.5
        %v351 = vmul.f32 %v287, 63.5
        %v352 = vmul.f32 %v288, 63.5
        %v353 = vmul.f32 %v289, 63.5
        %v354 = vmul.f32 %v290, 63.5
        %v355 = vmul.f32 %v291, 63.5
        %v356 = vmul.f32 %v292, 63.5
        %v357 = vmul.f32 %v293, 63.5
        %v358 = vmul.f32 %v294, 63.5
        %v359 = vmul.f32 %v295, 63.5
        %v360 = vmul.f32 %v296, 63.5
        %v361 = vmul.f32 %v297, 63.5
        %v362 = vmul.f32 %v298, 63.5
        %v363 = vmul.f32 %v299, 63.5
        %v364 = vmul.f32 %v300, 63.5
        %v365 = vmul.f32 %v301, 63.5
        %v366 = vmul.f32 %v302, 63.5
        %v367 = vmul.f32 %v303, 63.5
        %v368 = vmul.f32 %v304, 63.5
        %v369 = vmul.f32 %v305, 63.5
        %v370 = vmul.f32 %v306, 63.5
        %v371 = vmul.f32 %v307, 63.5
        %v372 = vmul.f32 %v308, 63.5
        %v373 = vmul.f32 %v309, 63.5
        %v374 = vmul.f32 %v310, 63.5
        %v375 = vmul.f32 %v311, 63.5
        %v376 = vmul.f32 %v312, 63.5
        %v377 = vmul.f32 %v313, 63.5
        %v378 = vmul.f32 %v314, 63.5
        %v379 = vmul.f32 %v315, 63.5
        %v380 = vmul.f32 %v316, 63.5
        %v381 = vmul.f32 %v317, 63.5
        %v382 = vmul.f32 %v318, 63.5
        %v383 = vmul.f32 %v319, 63.5
        %v384 = vmul.f32 %v320, 63.5
        %v385 = vmul.f32 %v321, 63.5
        %v386 = vmul.f32 %v322, 63.5
        %v387 = vmul.f32 %v323, 63.5
        %v388 = vmul.f32 %v324, 63.5
        %v389 = vmul.f32 %v325, 63.5
        %v390 = vmul.f32 %v326, 63.5
        %v391 = vmul.f32 %v327, 63.5
        %v392 = vmul.f32 %v328, 63.5
        %v393 = vmul.f32 %v329, 63.5
        %v394 = vmul.f32 %v330, 63.5
        %v395 = vmul.f32 %v331, 63.5
        %v396 = vround.ne.pseudo %v332
        %v397 = vround.ne.pseudo %v333
        %v398 = vround.ne.pseudo %v334
        %v399 = vround.ne.pseudo %v335
        %v400 = vround.ne.pseudo %v336
        %v401 = vround.ne.pseudo %v337
        %v402 = vround.ne.pseudo %v338
        %v403 = vround.ne.pseudo %v339
        %v404 = vround.ne.pseudo %v340
        %v405 = vround.ne.pseudo %v341
        %v406 = vround.ne.pseudo %v342
        %v407 = vround.ne.pseudo %v343
        %v408 = vround.ne.pseudo %v344
        %v409 = vround.ne.pseudo %v345
        %v410 = vround.ne.pseudo %v346
        %v411 = vround.ne.pseudo %v347
        %v412 = vround.ne.pseudo %v348
        %v413 = vround.ne.pseudo %v349
        %v414 = vround.ne.pseudo %v350
        %v415 = vround.ne.pseudo %v351
        %v416 = vround.ne.pseudo %v352
        %v417 = vround.ne.pseudo %v353
        %v418 = vround.ne.pseudo %v354
        %v419 = vround.ne.pseudo %v355
        %v420 = vround.ne.pseudo %v356
        %v421 = vround.ne.pseudo %v357
        %v422 = vround.ne.pseudo %v358
        %v423 = vround.ne.pseudo %v359
        %v424 = vround.ne.pseudo %v360
        %v425 = vround.ne.pseudo %v361
        %v426 = vround.ne.pseudo %v362
        %v427 = vround.ne.pseudo %v363
        %v428 = vround.ne.pseudo %v364
        %v429 = vround.ne.pseudo %v365
        %v430 = vround.ne.pseudo %v366
        %v431 = vround.ne.pseudo %v367
        %v432 = vround.ne.pseudo %v368
        %v433 = vround.ne.pseudo %v369
        %v434 = vround.ne.pseudo %v370
        %v435 = vround.ne.pseudo %v371
        %v436 = vround.ne.pseudo %v372
        %v437 = vround.ne.pseudo %v373
        %v438 = vround.ne.pseudo %v374
        %v439 = vround.ne.pseudo %v375
        %v440 = vround.ne.pseudo %v376
        %v441 = vround.ne.pseudo %v377
        %v442 = vround.ne.pseudo %v378
        %v443 = vround.ne.pseudo %v379
        %v444 = vround.ne.pseudo %v380
        %v445 = vround.ne.pseudo %v381
        %v446 = vround.ne.pseudo %v382
        %v447 = vround.ne.pseudo %v383
        %v448 = vround.ne.pseudo %v384
        %v449 = vround.ne.pseudo %v385
        %v450 = vround.ne.pseudo %v386
        %v451 = vround.ne.pseudo %v387
        %v452 = vround.ne.pseudo %v388
        %v453 = vround.ne.pseudo %v389
        %v454 = vround.ne.pseudo %v390
        %v455 = vround.ne.pseudo %v391
        %v456 = vround.ne.pseudo %v392
        %v457 = vround.ne.pseudo %v393
        %v458 = vround.ne.pseudo %v394
        %v459 = vround.ne.pseudo %v395
        %v460 = vmax.f32 %v396, -128.0
        %v461 = vmax.f32 %v397, -128.0
        %v462 = vmax.f32 %v398, -128.0
        %v463 = vmax.f32 %v399, -128.0
        %v464 = vmax.f32 %v400, -128.0
        %v465 = vmax.f32 %v401, -128.0
        %v466 = vmax.f32 %v402, -128.0
        %v467 = vmax.f32 %v403, -128.0
        %v468 = vmax.f32 %v404, -128.0
        %v469 = vmax.f32 %v405, -128.0
        %v470 = vmax.f32 %v406, -128.0
        %v471 = vmax.f32 %v407, -128.0
        %v472 = vmax.f32 %v408, -128.0
        %v473 = vmax.f32 %v409, -128.0
        %v474 = vmax.f32 %v410, -128.0
        %v475 = vmax.f32 %v411, -128.0
        %v476 = vmax.f32 %v412, -128.0
        %v477 = vmax.f32 %v413, -128.0
        %v478 = vmax.f32 %v414, -128.0
        %v479 = vmax.f32 %v415, -128.0
        %v480 = vmax.f32 %v416, -128.0
        %v481 = vmax.f32 %v417, -128.0
        %v482 = vmax.f32 %v418, -128.0
        %v483 = vmax.f32 %v419, -128.0
        %v484 = vmax.f32 %v420, -128.0
        %v485 = vmax.f32 %v421, -128.0
        %v486 = vmax.f32 %v422, -128.0
        %v487 = vmax.f32 %v423, -128.0
        %v488 = vmax.f32 %v424, -128.0
        %v489 = vmax.f32 %v425, -128.0
        %v490 = vmax.f32 %v426, -128.0
        %v491 = vmax.f32 %v427, -128.0
        %v492 = vmax.f32 %v428, -128.0
        %v493 = vmax.f32 %v429, -128.0
        %v494 = vmax.f32 %v430, -128.0
        %v495 = vmax.f32 %v431, -128.0
        %v496 = vmax.f32 %v432, -128.0
        %v497 = vmax.f32 %v433, -128.0
        %v498 = vmax.f32 %v434, -128.0
        %v499 = vmax.f32 %v435, -128.0
        %v500 = vmax.f32 %v436, -128.0
        %v501 = vmax.f32 %v437, -128.0
        %v502 = vmax.f32 %v438, -128.0
        %v503 = vmax.f32 %v439, -128.0
        %v504 = vmax.f32 %v440, -128.0
        %v505 = vmax.f32 %v441, -128.0
        %v506 = vmax.f32 %v442, -128.0
        %v507 = vmax.f32 %v443, -128.0
        %v508 = vmax.f32 %v444, -128.0
        %v509 = vmax.f32 %v445, -128.0
        %v510 = vmax.f32 %v446, -128.0
        %v511 = vmax.f32 %v447, -128.0
        %v512 = vmax.f32 %v448, -128.0
        %v513 = vmax.f32 %v449, -128.0
        %v514 = vmax.f32 %v450, -128.0
        %v515 = vmax.f32 %v451, -128.0
        %v516 = vmax.f32 %v452, -128.0
        %v517 = vmax.f32 %v453, -128.0
        %v518 = vmax.f32 %v454, -128.0
        %v519 = vmax.f32 %v455, -128.0
        %v520 = vmax.f32 %v456, -128.0
        %v521 = vmax.f32 %v457, -128.0
        %v522 = vmax.f32 %v458, -128.0
        %v523 = vmax.f32 %v459, -128.0
        %v524 = vmin.f32 %v460, 127.0
        %v525 = vmin.f32 %v461, 127.0
        %v526 = vmin.f32 %v462, 127.0
        %v527 = vmin.f32 %v463, 127.0
        %v528 = vmin.f32 %v464, 127.0
        %v529 = vmin.f32 %v465, 127.0
        %v530 = vmin.f32 %v466, 127.0
        %v531 = vmin.f32 %v467, 127.0
        %v532 = vmin.f32 %v468, 127.0
        %v533 = vmin.f32 %v469, 127.0
        %v534 = vmin.f32 %v470, 127.0
        %v535 = vmin.f32 %v471, 127.0
        %v536 = vmin.f32 %v472, 127.0
        %v537 = vmin.f32 %v473, 127.0
        %v538 = vmin.f32 %v474, 127.0
        %v539 = vmin.f32 %v475, 127.0
        %v540 = vmin.f32 %v476, 127.0
        %v541 = vmin.f32 %v477, 127.0
        %v542 = vmin.f32 %v478, 127.0
        %v543 = vmin.f32 %v479, 127.0
        %v544 = vmin.f32 %v480, 127.0
        %v545 = vmin.f32 %v481, 127.0
        %v546 = vmin.f32 %v482, 127.0
        %v547 = vmin.f32 %v483, 127.0
        %v548 = vmin.f32 %v484, 127.0
        %v549 = vmin.f32 %v485, 127.0
        %v550 = vmin.f32 %v486, 127.0
        %v551 = vmin.f32 %v487, 127.0
        %v552 = vmin.f32 %v488, 127.0
        %v553 = vmin.f32 %v489, 127.0
        %v554 = vmin.f32 %v490, 127.0
        %v555 = vmin.f32 %v491, 127.0
        %v556 = vmin.f32 %v492, 127.0
        %v557 = vmin.f32 %v493, 127.0
        %v558 = vmin.f32 %v494, 127.0
        %v559 = vmin.f32 %v495, 127.0
        %v560 = vmin.f32 %v496, 127.0
        %v561 = vmin.f32 %v497, 127.0
        %v562 = vmin.f32 %v498, 127.0
        %v563 = vmin.f32 %v499, 127.0
        %v564 = vmin.f32 %v500, 127.0
        %v565 = vmin.f32 %v501, 127.0
        %v566 = vmin.f32 %v502, 127.0
        %v567 = vmin.f32 %v503, 127.0
        %v568 = vmin.f32 %v504, 127.0
        %v569 = vmin.f32 %v505, 127.0
        %v570 = vmin.f32 %v506, 127.0
        %v571 = vmin.f32 %v507, 127.0
        %v572 = vmin.f32 %v508, 127.0
        %v573 = vmin.f32 %v509, 127.0
        %v574 = vmin.f32 %v510, 127.0
        %v575 = vmin.f32 %v511, 127.0
        %v576 = vmin.f32 %v512, 127.0
        %v577 = vmin.f32 %v513, 127.0
        %v578 = vmin.f32 %v514, 127.0
        %v579 = vmin.f32 %v515, 127.0
        %v580 = vmin.f32 %v516, 127.0
        %v581 = vmin.f32 %v517, 127.0
        %v582 = vmin.f32 %v518, 127.0
        %v583 = vmin.f32 %v519, 127.0
        %v584 = vmin.f32 %v520, 127.0
        %v585 = vmin.f32 %v521, 127.0
        %v586 = vmin.f32 %v522, 127.0
        %v587 = vmin.f32 %v523, 127.0
        %v588 = vmul.f32 %v524, 0.015748031
        %v589 = vmul.f32 %v525, 0.015748031
        %v590 = vmul.f32 %v526, 0.015748031
        %v591 = vmul.f32 %v527, 0.015748031
        %v592 = vmul.f32 %v528, 0.015748031
        %v593 = vmul.f32 %v529, 0.015748031
        %v594 = vmul.f32 %v530, 0.015748031
        %v595 = vmul.f32 %v531, 0.015748031
        %v596 = vmul.f32 %v532, 0.015748031
        %v597 = vmul.f32 %v533, 0.015748031
        %v598 = vmul.f32 %v534, 0.015748031
        %v599 = vmul.f32 %v535, 0.015748031
        %v600 = vmul.f32 %v536, 0.015748031
        %v601 = vmul.f32 %v537, 0.015748031
        %v602 = vmul.f32 %v538, 0.015748031
        %v603 = vmul.f32 %v539, 0.015748031
        %v604 = vmul.f32 %v540, 0.015748031
        %v605 = vmul.f32 %v541, 0.015748031
        %v606 = vmul.f32 %v542, 0.015748031
        %v607 = vmul.f32 %v543, 0.015748031
        %v608 = vmul.f32 %v544, 0.015748031
        %v609 = vmul.f32 %v545, 0.015748031
        %v610 = vmul.f32 %v546, 0.015748031
        %v611 = vmul.f32 %v547, 0.015748031
        %v612 = vmul.f32 %v548, 0.015748031
        %v613 = vmul.f32 %v549, 0.015748031
        %v614 = vmul.f32 %v550, 0.015748031
        %v615 = vmul.f32 %v551, 0.015748031
        %v616 = vmul.f32 %v552, 0.015748031
        %v617 = vmul.f32 %v553, 0.015748031
        %v618 = vmul.f32 %v554, 0.015748031
        %v619 = vmul.f32 %v555, 0.015748031
        %v620 = vmul.f32 %v556, 0.015748031
        %v621 = vmul.f32 %v557, 0.015748031
        %v622 = vmul.f32 %v558, 0.015748031
        %v623 = vmul.f32 %v559, 0.015748031
        %v624 = vmul.f32 %v560, 0.015748031
        %v625 = vmul.f32 %v561, 0.015748031
        %v626 = vmul.f32 %v562, 0.015748031
        %v627 = vmul.f32 %v563, 0.015748031
        %v628 = vmul.f32 %v564, 0.015748031
        %v629 = vmul.f32 %v565, 0.015748031
        %v630 = vmul.f32 %v566, 0.015748031
        %v631 = vmul.f32 %v567, 0.015748031
        %v632 = vmul.f32 %v568, 0.015748031
        %v633 = vmul.f32 %v569, 0.015748031
        %v634 = vmul.f32 %v570, 0.015748031
        %v635 = vmul.f32 %v571, 0.015748031
        %v636 = vmul.f32 %v572, 0.015748031
        %v637 = vmul.f32 %v573, 0.015748031
        %v638 = vmul.f32 %v574, 0.015748031
        %v639 = vmul.f32 %v575, 0.015748031
        %v640 = vmul.f32 %v576, 0.015748031
        %v641 = vmul.f32 %v577, 0.015748031
        %v642 = vmul.f32 %v578, 0.015748031
        %v643 = vmul.f32 %v579, 0.015748031
        %v644 = vmul.f32 %v580, 0.015748031
        %v645 = vmul.f32 %v581, 0.015748031
        %v646 = vmul.f32 %v582, 0.015748031
        %v647 = vmul.f32 %v583, 0.015748031
        %v648 = vmul.f32 %v584, 0.015748031
        %v649 = vmul.f32 %v585, 0.015748031
        %v650 = vmul.f32 %v586, 0.015748031
        %v651 = vmul.f32 %v587, 0.015748031
        %652 = vst [vmem:[%s137] sm:$0xff] %v588
        %653 = vst [vmem:[%s137 + $0x8] sm:$0xff] %v589
        %654 = vst [vmem:[%s137 + $0x10] sm:$0xff] %v590
        %655 = vst [vmem:[%s137 + $0x18] sm:$0xff] %v591
        %656 = vst [vmem:[%s137 + $0x20] sm:$0xff] %v592
        %657 = vst [vmem:[%s137 + $0x28] sm:$0xff] %v593
        %658 = vst [vmem:[%s137 + $0x30] sm:$0xff] %v594
        %659 = vst [vmem:[%s137 + $0x38] sm:$0xff] %v595
        %660 = vst [vmem:[%s137 + $0x40] sm:$0xff] %v596
        %661 = vst [vmem:[%s137 + $0x48] sm:$0xff] %v597
        %662 = vst [vmem:[%s137 + $0x50] sm:$0xff] %v598
        %663 = vst [vmem:[%s137 + $0x58] sm:$0xff] %v599
        %664 = vst [vmem:[%s137 + $0x60] sm:$0xff] %v600
        %665 = vst [vmem:[%s137 + $0x68] sm:$0xff] %v601
        %666 = vst [vmem:[%s137 + $0x70] sm:$0xff] %v602
        %667 = vst [vmem:[%s137 + $0x78] sm:$0xff] %v603
        %668 = vst [vmem:[%s137 + $0x80] sm:$0xff] %v604
        %669 = vst [vmem:[%s137 + $0x88] sm:$0xff] %v605
        %670 = vst [vmem:[%s137 + $0x90] sm:$0xff] %v606
        %671 = vst [vmem:[%s137 + $0x98] sm:$0xff] %v607
        %672 = vst [vmem:[%s137 + $0xa0] sm:$0xff] %v608
        %673 = vst [vmem:[%s137 + $0xa8] sm:$0xff] %v609
        %674 = vst [vmem:[%s137 + $0xb0] sm:$0xff] %v610
        %675 = vst [vmem:[%s137 + $0xb8] sm:$0xff] %v611
        %676 = vst [vmem:[%s137 + $0xc0] sm:$0xff] %v612
        %677 = vst [vmem:[%s137 + $0xc8] sm:$0xff] %v613
        %678 = vst [vmem:[%s137 + $0xd0] sm:$0xff] %v614
        %679 = vst [vmem:[%s137 + $0xd8] sm:$0xff] %v615
        %680 = vst [vmem:[%s137 + $0xe0] sm:$0xff] %v616
        %681 = vst [vmem:[%s137 + $0xe8] sm:$0xff] %v617
        %682 = vst [vmem:[%s137 + $0xf0] sm:$0xff] %v618
        %683 = vst [vmem:[%s137 + $0xf8] sm:$0xff] %v619
        %684 = vst [vmem:[%s137 + $0x100] sm:$0xff] %v620
        %685 = vst [vmem:[%s137 + $0x108] sm:$0xff] %v621
        %686 = vst [vmem:[%s137 + $0x110] sm:$0xff] %v622
        %687 = vst [vmem:[%s137 + $0x118] sm:$0xff] %v623
        %688 = vst [vmem:[%s137 + $0x120] sm:$0xff] %v624
        %689 = vst [vmem:[%s137 + $0x128] sm:$0xff] %v625
        %690 = vst [vmem:[%s137 + $0x130] sm:$0xff] %v626
        %691 = vst [vmem:[%s137 + $0x138] sm:$0xff] %v627
        %692 = vst [vmem:[%s137 + $0x140] sm:$0xff] %v628
        %693 = vst [vmem:[%s137 + $0x148] sm:$0xff] %v629
        %694 = vst [vmem:[%s137 + $0x150] sm:$0xff] %v630
        %695 = vst [vmem:[%s137 + $0x158] sm:$0xff] %v631
        %696 = vst [vmem:[%s137 + $0x160] sm:$0xff] %v632
        %697 = vst [vmem:[%s137 + $0x168] sm:$0xff] %v633
        %698 = vst [vmem:[%s137 + $0x170] sm:$0xff] %v634
        %699 = vst [vmem:[%s137 + $0x178] sm:$0xff] %v635
        %700 = vst [vmem:[%s137 + $0x180] sm:$0xff] %v636
        %701 = vst [vmem:[%s137 + $0x188] sm:$0xff] %v637
        %702 = vst [vmem:[%s137 + $0x190] sm:$0xff] %v638
        %703 = vst [vmem:[%s137 + $0x198] sm:$0xff] %v639
        %704 = vst [vmem:[%s137 + $0x1a0] sm:$0xff] %v640
        %705 = vst [vmem:[%s137 + $0x1a8] sm:$0xff] %v641
        %706 = vst [vmem:[%s137 + $0x1b0] sm:$0xff] %v642
        %707 = vst [vmem:[%s137 + $0x1b8] sm:$0xff] %v643
        %708 = vst [vmem:[%s137 + $0x1c0] sm:$0xff] %v644
        %709 = vst [vmem:[%s137 + $0x1c8] sm:$0xff] %v645
        %710 = vst [vmem:[%s137 + $0x1d0] sm:$0xff] %v646
        %711 = vst [vmem:[%s137 + $0x1d8] sm:$0xff] %v647
        %712 = vst [vmem:[%s137 + $0x1e0] sm:$0xff] %v648
        %713 = vst [vmem:[%s137 + $0x1e8] sm:$0xff] %v649
        %714 = vst [vmem:[%s137 + $0x1f0] sm:$0xff] %v650
        %715 = vst [vmem:[%s137 + $0x1f8] sm:$0xff] %v651
        %s716 = sand.u32 %s52, 1
        %s717 = scalar_lea.sflag [#allocation4], %s716
        %s718 = sand.u32 %s52, 1
        %s719 = smul.addr %s718, 512
        %s720 = scalar_lea.vmem [#allocation5], %s719
        // Predicated region
        $region29: #{tpu_custom_call.1} parent=23 // pred_check
          %p721 = pneg %p62
        $region30: #{tpu_custom_call.1} parent=23 // pred_check_branch
          %723 = sbr.rel (%p721) target = $region32
        $region31: #{tpu_custom_call.1} parent=23 // pred_region
          %s724 = smul.u32 4, %s18
          %726 = vsyncadd %s717, 0
          %s727 = smul.addr %s724, 16
          %s728 = smul.addr %s727, 8
          %s729 = scalar_lea.hbm %s1, %s728
          %s730 = sshll.u32 %s720, 4
          %s731 = int_to_ptr.vmem [resolvable:$true] %s730
          %s732 = sshll.u32 %s729, 4
          %s733 = int_to_ptr.hbm [resolvable:$true] %s732
          %738 = dma.vmem_to_hbm [thread:$0]  %s731, 8192, %s733, %s717, 2048, 2048, 128
        $region32: #{tpu_custom_call.1} parent=23 // pred_fallthru
          _
      $region24: #{tpu_custom_call.1} parent=5 // pred_fallthru
        _
      %p739 = scmp.le.s32.totalorder 2, %s13
      // Predicated region
      $region33: #{tpu_custom_call.1} parent=5 // pred_check
        %p740 = pneg %p739
      $region34: #{tpu_custom_call.1} parent=5 // pred_check_branch
        %742 = sbr.rel (%p740) target = $region36
      $region35: #{tpu_custom_call.1} parent=5 // pred_region
        %s743 = ssub.s32 %s13, 2
        // Predicated region
        $region37: #{tpu_custom_call.1} parent=35 // pred_check
          %p744 = pneg %p68
        $region38: #{tpu_custom_call.1} parent=35 // pred_check_branch
          %746 = sbr.rel (%p744) target = $region40
        $region39: #{tpu_custom_call.1} parent=35 // pred_region
          %s747 = sand.u32 %s53, 1
          %s748 = scalar_lea.sflag [#allocation4], %s747
          %s749 = sand.u32 %s53, 1
          %s750 = smul.addr %s749, 512
          %s751 = scalar_lea.vmem [#allocation5], %s750
          %753 = dma.done %s748, 8192
        $region40: #{tpu_custom_call.1} parent=35 // pred_fallthru
          _
      $region36: #{tpu_custom_call.1} parent=5 // pred_fallthru
        _
    $region6: #{tpu_custom_call.1} parent=1 // loop_footer
      %s17 = sadd.s32 1, %s13
    $region7: #{tpu_custom_call.1} parent=1 // loop_footer_branch
      %12 = sbr.rel target = $region3
    $region8: #{tpu_custom_call.1} parent=1 // loop_exit
      _
    %754 = vsyncpa [#allocation3], 1
    %s755 = scalar_lea.sflag [#allocation3], 1
    %756 = vsyncpa %s755, 1
    %757 = vsyncpa [#allocation4], 1
    %s758 = scalar_lea.sflag [#allocation4], 1
    %759 = vsyncpa %s758, 1

</llo_original>
